<compile_context>
chip_gen: v6e
topology: v6e:2x2x1
jax: 0.10.0
libtpu: 0.0.40
codegen_flags: <defaults>
</compile_context>

<pallas_src>
import jax
import jax.numpy as jnp
from jax.experimental import pallas as pl
from jax.experimental.pallas import tpu as pltpu


# =============================================================================
# 1) Module-exact forward: exp(logit_scale)  (0-d scalar)
# =============================================================================
def _exp_scale_kernel(scale_ref, out_ref):
    # Upcast to f32 for the EUP transcendental, cast back to parameter dtype.
    out_ref[...] = jnp.exp(scale_ref[...].astype(jnp.float32)).astype(out_ref.dtype)


def scale_learner_forward(logit_scale: jax.Array, *, use_pallas: bool = False) -> jax.Array:
    """ScaleLearner.forward(): returns exp(logit_scale).

    Per perf review, the default path is plain jnp.exp — a dedicated kernel
    launch plus two DMAs for a 4-byte op is unrecoverable fixed overhead.
    `use_pallas=True` keeps a minimal grid-less kernel only to mirror the
    module API in Pallas.
    """
    if not use_pallas:
        return jnp.exp(logit_scale)

    dtype = logit_scale.dtype
    out = pl.pallas_call(
        _exp_scale_kernel,
        out_shape=jax.ShapeDtypeStruct((1, 1), dtype),
        in_specs=[pl.BlockSpec(memory_space=pltpu.MemorySpace.VMEM)],
        out_specs=pl.BlockSpec(memory_space=pltpu.MemorySpace.VMEM),
    )(jnp.reshape(logit_scale, (1, 1)))
    return out.reshape(())


# =============================================================================
# 2) Tiled fused consumer: out = logits * exp(logit_scale)
# =============================================================================
_TARGET_BM = 512    # sublane-axis tile (multiple of 8)
_TARGET_BN = 1024   # lane-axis tile (large multiple of 128 -> unmasked vst)


def _scaled_logits_kernel(scale_ref, x_ref, o_ref):
    # Scalar lives in SMEM; exp runs once per grid step in f32 on the EUP
    # (free slot).  Multiply in the logits' native dtype: bf16-native VPU on
    # v6e/v7x, plain f32 for f32 logits.
    s = jnp.exp(scale_ref[0, 0])                 # f32 scalar
    x = x_ref[...]
    o_ref[...] = (x * s.astype(x.dtype)).astype(o_ref.dtype)


def scaled_logits(logit_scale: jax.Array, logits: jax.Array) -> jax.Array:
    """logits * exp(logit_scale) as a tiled, auto-pipelined elementwise sweep."""
    M, N = logits.shape
    bm = M if M < _TARGET_BM else _TARGET_BM
    bn = N if N < _TARGET_BN else _TARGET_BN
    grid = (pl.cdiv(M, bm), pl.cdiv(N, bn))
    itemsize = jnp.dtype(logits.dtype).itemsize
    scale_smem = jnp.asarray(logit_scale, jnp.float32).reshape(1, 1)

    return pl.pallas_call(
        _scaled_logits_kernel,
        out_shape=jax.ShapeDtypeStruct((M, N), logits.dtype),
        grid_spec=pltpu.PrefetchScalarGridSpec(
            num_scalar_prefetch=0,
            grid=grid,
            in_specs=[
                # Resident scalar: same (0,0) block every step -> no re-DMA.
                pl.BlockSpec((1, 1), lambda i, j: (0, 0),
                             memory_space=pltpu.MemorySpace.SMEM),
                pl.BlockSpec((bm, bn), lambda i, j: (i, j)),
            ],
            out_specs=pl.BlockSpec((bm, bn), lambda i, j: (i, j)),
        ),
        compiler_params=pltpu.CompilerParams(
            dimension_semantics=("parallel", "parallel")),
        cost_estimate=pl.CostEstimate(
            flops=M * N, transcendentals=1,
            bytes_accessed=2 * M * N * itemsize),
    )(scale_smem, logits)


# =============================================================================
# 3) Biggest structural win: fold exp(logit_scale) into the matmul epilogue
#    logits = exp(logit_scale) * (img_emb @ txt_emb.T)
# =============================================================================
def _logits_matmul_kernel(scale_ref, a_ref, b_ref, o_ref, acc_ref):
    @pl.when(pl.program_id(2) == 0)
    def _():
        acc_ref[...] = jnp.zeros_like(acc_ref)

    acc_ref[...] += jnp.dot(a_ref[...], b_ref[...],
                            preferred_element_type=jnp.float32)

    @pl.when(pl.program_id(2) == pl.num_programs(2) - 1)
    def _():
        s = jnp.exp(scale_ref[0, 0])             # once per output tile, f32/EUP
        o_ref[...] = (acc_ref[...] * s).astype(o_ref.dtype)


def clip_logits(logit_scale: jax.Array, img_emb: jax.Array, txt_emb: jax.Array,
                *, tm: int = 128, tn: int = 128, tk: int = 128,
                out_dtype=jnp.float32) -> jax.Array:
    """exp(logit_scale) * (img_emb @ txt_emb.T) with the scale fused into the
    matmul finalize block — no separate HBM read+write of the logits tensor."""
    M, K = img_emb.shape
    N, K2 = txt_emb.shape
    assert K == K2, (img_emb.shape, txt_emb.shape)
    tm, tn, tk = min(tm, M), min(tn, N), min(tk, K)
    rhs = txt_emb.T                              # (K, N): lane-dense RHS
    scale_smem = jnp.asarray(logit_scale, jnp.float32).reshape(1, 1)
    grid = (pl.cdiv(M, tm), pl.cdiv(N, tn), pl.cdiv(K, tk))

    return pl.pallas_call(
        _logits_matmul_kernel,
        out_shape=jax.ShapeDtypeStruct((M, N), out_dtype),
        grid_spec=pltpu.PrefetchScalarGridSpec(
            num_scalar_prefetch=0,
            grid=grid,
            in_specs=[
                pl.BlockSpec((1, 1), lambda i, j, k: (0, 0),
                             memory_space=pltpu.MemorySpace.SMEM),
                pl.BlockSpec((tm, tk), lambda i, j, k: (i, k)),
                pl.BlockSpec((tk, tn), lambda i, j, k: (k, j)),
            ],
            out_specs=pl.BlockSpec((tm, tn), lambda i, j, k: (i, j)),
            scratch_shapes=[pltpu.VMEM((tm, tn), jnp.float32)],
        ),
        compiler_params=pltpu.CompilerParams(
            dimension_semantics=("parallel", "parallel", "arbitrary")),
    )(scale_smem, img_emb, rhs)


if __name__ == "__main__":
    key = jax.random.PRNGKey(0)
    k1, k2, k3, k4 = jax.random.split(key, 4)

    # Parameter init exactly as in __init__: fixed constant 4.6052 = log(100).
    logit_scale = jnp.asarray(4.6052, dtype=jnp.float32)

    # --- 1) Module-exact forward ---------------------------------------------
    out = jax.block_until_ready(scale_learner_forward(logit_scale))
    assert out.shape == ()
    assert jnp.allclose(out, jnp.exp(logit_scale), rtol=1e-6, atol=1e-6)

    out_p = jax.block_until_ready(scale_learner_forward(logit_scale, use_pallas=True))
    assert out_p.shape == () and out_p.dtype == jnp.float32
    assert jnp.allclose(out_p, jnp.exp(logit_scale), rtol=1e-5, atol=1e-5)

    ls_bf16 = logit_scale.astype(jnp.bfloat16)
    out_bf16 = jax.block_until_ready(scale_learner_forward(ls_bf16, use_pallas=True))
    assert out_bf16.shape == () and out_bf16.dtype == jnp.bfloat16
    assert jnp.allclose(out_bf16.astype(jnp.float32),
                        jnp.exp(ls_bf16.astype(jnp.float32)),
                        rtol=1e-2, atol=1e-1)

    # --- 2) Tiled elementwise consumer: logits * exp(scale) -------------------
    logits_f32 = jax.random.normal(k1, (1024, 2048), dtype=jnp.float32)
    fused = jax.block_until_ready(scaled_logits(logit_scale, logits_f32))
    ref = logits_f32 * jnp.exp(logit_scale)
    assert fused.shape == logits_f32.shape and fused.dtype == logits_f32.dtype
    assert jnp.allclose(fused, ref, rtol=1e-5, atol=1e-3), (
        jnp.max(jnp.abs(fused - ref)))

    logits_bf16 = jax.random.normal(k2, (256, 512), dtype=jnp.bfloat16)
    fused_bf16 = jax.block_until_ready(scaled_logits(logit_scale, logits_bf16))
    ref_bf16 = logits_bf16.astype(jnp.float32) * jnp.exp(logit_scale)
    assert fused_bf16.dtype == jnp.bfloat16
    assert jnp.allclose(fused_bf16.astype(jnp.float32), ref_bf16,
                        rtol=2e-2, atol=2e-1), (
        jnp.max(jnp.abs(fused_bf16.astype(jnp.float32) - ref_bf16)))

    # --- 3) Matmul-epilogue fusion: exp(scale) * (img @ txt.T) -----------------
    img = jax.random.normal(k3, (256, 128), dtype=jnp.bfloat16)
    txt = jax.random.normal(k4, (256, 128), dtype=jnp.bfloat16)
    logits_fused = jax.block_until_ready(clip_logits(logit_scale, img, txt))
    logits_ref = (jnp.dot(img, txt.T, preferred_element_type=jnp.float32)
                  * jnp.exp(logit_scale))
    assert logits_fused.shape == (256, 256) and logits_fused.dtype == jnp.float32
    assert jnp.allclose(logits_fused, logits_ref, rtol=2e-2, atol=2e-1), (
        jnp.max(jnp.abs(logits_fused - logits_ref)))

    print("KERNEL_OK")
</pallas_src>

<mosaic_0001>
module attributes {stable_mosaic.version = 11 : i64} {
  func.func @_exp_scale_kernel(%arg0: memref<1x1xf32, #tpu.memory_space<vmem>>, %arg1: memref<1x1xf32, #tpu.memory_space<vmem>>) attributes {dimension_semantics = [], scalar_prefetch = 0 : i64, scratch_operands = 0 : i64, tpu.core_type = #tpu.core_type<tc>} {
    %c0 = arith.constant 0 : index
    %c0_0 = arith.constant 0 : index
    %0 = vector.load %arg0[%c0, %c0_0] : memref<1x1xf32, #tpu.memory_space<vmem>>, vector<1x1xf32>
    %1 = math.exp %0 : vector<1x1xf32>
    %c0_1 = arith.constant 0 : index
    %c0_2 = arith.constant 0 : index
    %2 = vector.load %arg1[%c0_1, %c0_2] : memref<1x1xf32, #tpu.memory_space<vmem>>, vector<1x1xf32>
    tpu.vector_store %arg1[%c0_1, %c0_2], %1 {strides = array<i32>} : memref<1x1xf32, #tpu.memory_space<vmem>>, vector<1x1xf32>,
    return
  }
}

</mosaic_0001>

<llo_original>
// kernel: tpu_custom_call.1
$region0: #{tpu_custom_call.1}
  #allocation0 [shape = 'u32[]', space=smem, size = 0x4, offset = 0x4, fixed_abs, tag = 'smem constant byte address 0x4 - core index']
  #allocation1 [shape = 'u32[144,128]{1,0:T(1,128)}', space=vmem, size = 0x12000, scoped, tag = 'internal scratch']
  #allocation2 [shape = 'f32[1,1]{1,0:T(1,128)S(1)}', space=vmem, size = 0x200, scoped, tag = 'scoped memory for tpu_custom_call.1']
  %s0 = inlined_call_operand.<no memory space> [shape: f32[1,1], index: 0, kind: input, shape index: {}]
  %s1 = inlined_call_operand.hbm [shape: f32[1,1], index: 1, kind: output, shape index: {}]
  %s2 = sld [smem:[#allocation0]]
  $region14: #{tpu_custom_call.1} parent=0
    _
  %s4 = ssub.s32 1, %s2
  %s5 = scalar_select 0, %s4, %s2
  %v6 = vstv %s0
  %7 = vst [vmem:[#allocation2] sm:$0x1] %v6
  $region1: #{tpu_custom_call.1} parent=0
    #allocation3 [shape = 'u8[512]{0}', space=vmem, size = 0x400, scoped, tag = 'output window, operand 0, single buffered']
    #allocation4 [shape = 's32[1]{0}', space=sflag, size = 0x4, scoped, tag = 'scoped memory for tpu_custom_call.1']
    %8 = vsyncpa [#allocation4], 0
    // Predicated region
    $region2: #{tpu_custom_call.1} parent=1 // pred_check
      _
    $region3: #{tpu_custom_call.1} parent=1 // pred_check_branch
      %10 = sbr.rel (0) target = $region5
    $region4: #{tpu_custom_call.1} parent=1 // pred_region
      _
    $region5: #{tpu_custom_call.1} parent=1 // pred_fallthru
      _
    %v11 = vld [vmem:[#allocation2] sm:$0x1]
    %v12 = vmul.f32 %v11, 1.442695
    %v13 = vpow.pop %v12
    %vm14 = vcmask 0
    %15 = vst.msk [vmem:[#allocation3] sm:$0x1] %vm14, %v13
    // Predicated region
    $region6: #{tpu_custom_call.1} parent=1 // pred_check
      _
    $region7: #{tpu_custom_call.1} parent=1 // pred_check_branch
      %17 = sbr.rel (0) target = $region9
    $region8: #{tpu_custom_call.1} parent=1 // pred_region
      %s19 = ssub.s32 16, 16
      %20 = vsyncadd [#allocation4], %s19
      %s22 = sshll.u32 [#allocation3], 4
      %s23 = int_to_ptr.vmem [resolvable:$true] %s22
      %25 = dma.vmem_to_hbm [thread:$0]  %s23, 16, %s1, [#allocation4]
    $region9: #{tpu_custom_call.1} parent=1 // pred_fallthru
      _
    // Predicated region
    $region10: #{tpu_custom_call.1} parent=1 // pred_check
      _
    $region11: #{tpu_custom_call.1} parent=1 // pred_check_branch
      %27 = sbr.rel (0) target = $region13
    $region12: #{tpu_custom_call.1} parent=1 // pred_region
      %28 = dma.done [#allocation4], 16
    $region13: #{tpu_custom_call.1} parent=1 // pred_fallthru
      _
    %29 = vsyncpa [#allocation4], 1

</llo_original>
